<compile_context>
chip_gen: v7x
topology: tpu7x:2x2x1
jax: 0.10.0
libtpu: 0.0.40
codegen_flags: <defaults>
</compile_context>

<pallas_src>
import jax
import jax.numpy as jnp
from jax import lax
from jax.experimental import pallas as pl
from jax.experimental.pallas import tpu as pltpu

_LANES = 128


def _encoder_kernel(xc_ref, edge_ref, w1_ref, b1_ref, w2_ref, b2_ref, o_ref):
    # xc_ref  : (TT, 3C)    bf16  im2col rows [x[t-1] | x[t] | x[t+1]] for this tile
    # edge_ref: (2, 3C)     bf16  im2col rows at t = g0-1 and t = g0+TT (zeros outside [0, T))
    # w1_ref  : (3C, Dp)    bf16  conv1 weights, tap-major rows (row k*C+c multiplies x[t+k-1, c])
    # b1_ref  : (1, Dp)     f32
    # w2_ref  : (3, Dp, Dp) bf16  conv2 weights, tap-major (tap k multiplies h[t+k-1])
    # b2_ref  : (1, Dp)     f32
    # o_ref   : (TT, Dp)    bf16 (or caller dtype) lane-dense output tile
    TT = o_ref.shape[0]
    f32 = jnp.float32
    i_t = pl.program_id(1)
    n_t = pl.num_programs(1)

    w1 = w1_ref[...]
    b1 = b1_ref[...]
    b2 = b2_ref[...]

    # ---- Conv1: one fused im2col matmul (K = 3*C), bf16 operands, f32 accumulation ----
    h = jnp.dot(xc_ref[...], w1, preferred_element_type=f32) + b1
    h = jnp.maximum(h, 0.0)                                                   # (TT, Dp) f32

    # Hidden rows just outside the tile, needed by conv2's boundary taps.
    he = jnp.maximum(jnp.dot(edge_ref[...], w1, preferred_element_type=f32) + b1, 0.0)
    h_left = jnp.where(i_t == 0, 0.0, he[0:1])          # h[g0-1]; conv2 zero-pads at t = -1
    h_right = jnp.where(i_t == n_t - 1, 0.0, he[1:2])   # h[g0+TT];                   t = T

    # ---- Conv2: shift the bf16 operand *before* the matmuls, single f32 accumulator ----
    hb = h.astype(jnp.bfloat16)
    hb_m1 = jnp.concatenate([h_left.astype(jnp.bfloat16), hb[:TT - 1]], axis=0)   # h[t-1]
    hb_p1 = jnp.concatenate([hb[1:], h_right.astype(jnp.bfloat16)], axis=0)       # h[t+1]

    acc = jnp.dot(hb_m1, w2_ref[0], preferred_element_type=f32)
    acc = acc + jnp.dot(hb, w2_ref[1], preferred_element_type=f32)
    acc = acc + jnp.dot(hb_p1, w2_ref[2], preferred_element_type=f32)
    o_ref[...] = jnp.maximum(acc + b2, 0.0).astype(o_ref.dtype)


def _vmem_bytes_estimate(tt, dp, c3, out_bytes):
    tile = tt * dp
    live = tile * (4 + 4 + 3 * 2)                       # h, acc (f32) + hb/hb_m1/hb_p1 (bf16)
    io = 2 * (tt * c3 * 2) + 2 * (tile * out_bytes)     # double-buffered input / output tiles
    wts = 2 * (c3 * dp * 2 + 3 * dp * dp * 2 + 2 * dp * 4 + 2 * c3 * 2)
    return live + io + wts + (1 << 20)                  # ~1 MiB slack for compiler scratch


def encoder_forward(x, w1, b1, w2, b2, *, tile_t=None, out_dtype=jnp.bfloat16,
                    trim_output=True):
    """x: (B, T, C) f32.  w1: (D, C, 3), b1: (D,), w2: (D, D, 3), b2: (D,) (PyTorch Conv1d layout).

    Returns (B, T, D) in `out_dtype` (bf16 by default: the kernel is output-write bound).
    When D is not a multiple of 128 the kernel writes a lane-padded (B, T, Dp) array; pass
    trim_output=False to hand that layout straight to the consumer and skip the slice pass.
    """
    B, T, C = x.shape
    D = w1.shape[0]
    C3 = 3 * C
    Dp = max(_LANES, ((D + _LANES - 1) // _LANES) * _LANES)   # lane-dense hidden/output width

    out_bytes = jnp.dtype(out_dtype).itemsize
    try:
        vmem_cap = pltpu.get_tpu_info().vmem_capacity_bytes
    except Exception:
        vmem_cap = 64 * 1024 * 1024        # assume the smallest (v7x) VMEM if the query fails
    budget = int(0.55 * vmem_cap)

    if tile_t is None:
        cands = [c for c in (2048, 1024, 512, 256, 128, 64, 32, 16) if T % c == 0]
        fitting = [c for c in cands if _vmem_bytes_estimate(c, Dp, C3, out_bytes) <= budget]
        cands = fitting or [16 if T % 16 == 0 else T]
        tile_t = cands[0]
        # keep the flattened parallel grid >= 2 so a dual-TC part (v7x) doesn't strand a core
        if B * (T // tile_t) < 2:
            smaller = [c for c in cands if T // c >= 2]
            if smaller:
                tile_t = smaller[0]
    TT = tile_t
    assert T % TT == 0, "T must be divisible by the time tile"
    assert TT == T or TT % 16 == 0, "time tile must be a multiple of 16 (bf16 sublane packing)"
    NT = T // TT

    xb = x.astype(jnp.bfloat16)

    # im2col over time (x is small: C = n_channels), zero-padded at the sequence ends.
    zrow = jnp.zeros((B, 1, C), jnp.bfloat16)
    x_m1 = jnp.concatenate([zrow, xb[:, :T - 1, :]], axis=1)        # x[t-1]
    x_p1 = jnp.concatenate([xb[:, 1:, :], zrow], axis=1)            # x[t+1]
    x_cat = jnp.concatenate([x_m1, xb, x_p1], axis=-1)              # (B, T, 3C)

    # Per-tile 2-row edge operand: im2col rows at t = g0-1 and t = g0+TT (zeros at the global
    # sequence ends; those rows are masked off in-kernel anyway).
    zedge = jnp.zeros((B, 1, 1, C3), jnp.bfloat16)
    if NT > 1:
        left = x_cat[:, TT - 1:T - 1:TT, :][:, :, None, :]          # rows TT-1, 2TT-1, ...
        right = x_cat[:, TT:T:TT, :][:, :, None, :]                 # rows TT, 2TT, ...
        edge = jnp.concatenate([jnp.concatenate([zedge, left], axis=1),
                                jnp.concatenate([right, zedge], axis=1)], axis=2)  # (B, NT, 2, 3C)
    else:
        edge = jnp.zeros((B, 1, 2, C3), jnp.bfloat16)

    # Weights: PyTorch (out, in, k) -> tap-major, lane-padded to Dp, bf16 for the MXU.
    w1p = jnp.transpose(w1, (2, 1, 0)).reshape(C3, D)
    w1p = jnp.pad(w1p, ((0, 0), (0, Dp - D))).astype(jnp.bfloat16)                  # (3C, Dp)
    w2p = jnp.pad(jnp.transpose(w2, (2, 1, 0)),
                  ((0, 0), (0, Dp - D), (0, Dp - D))).astype(jnp.bfloat16)          # (3, Dp, Dp)
    b1p = jnp.pad(b1, (0, Dp - D)).reshape(1, Dp).astype(jnp.float32)
    b2p = jnp.pad(b2, (0, Dp - D)).reshape(1, Dp).astype(jnp.float32)

    est = _vmem_bytes_estimate(TT, Dp, C3, out_bytes)
    vmem_limit = int(min(max(32 * 1024 * 1024, 2 * est), 3 * vmem_cap // 4))

    out = pl.pallas_call(
        _encoder_kernel,
        out_shape=jax.ShapeDtypeStruct((B, T, Dp), out_dtype),
        grid_spec=pltpu.PrefetchScalarGridSpec(
            num_scalar_prefetch=0,
            grid=(B, NT),
            in_specs=[
                pl.BlockSpec((pl.Squeezed(), TT, C3), lambda b, i: (b, i, 0)),
                pl.BlockSpec((pl.Squeezed(), pl.Squeezed(), 2, C3), lambda b, i: (b, i, 0, 0)),
                # Constant index_maps: weights / biases are DMA'd once and reused.
                pl.BlockSpec((C3, Dp), lambda b, i: (0, 0)),
                pl.BlockSpec((1, Dp), lambda b, i: (0, 0)),
                pl.BlockSpec((3, Dp, Dp), lambda b, i: (0, 0, 0)),
                pl.BlockSpec((1, Dp), lambda b, i: (0, 0)),
            ],
            out_specs=pl.BlockSpec((pl.Squeezed(), TT, Dp), lambda b, i: (b, i, 0)),
        ),
        compiler_params=pltpu.CompilerParams(
            dimension_semantics=("parallel", "parallel"),
            vmem_limit_bytes=vmem_limit),
    )(x_cat, edge, w1p, b1p, w2p, b2p)

    if trim_output and Dp != D:
        out = out[:, :, :D]     # perf note: pass trim_output=False to skip this extra HBM pass
    return out


def encoder_ref(x, w1, b1, w2, b2, *, quantized=False):
    """Pure-JAX reference matching PyTorch Encoder.forward.
    quantized=True mirrors the kernel's bf16 operand/hidden rounding (f32 accumulation)."""
    if quantized:
        q = lambda a: a.astype(jnp.bfloat16).astype(jnp.float32)
        x, w1, w2 = q(x), q(w1), q(w2)
    xc = jnp.transpose(x, (0, 2, 1))                                       # (B, C, T)
    dn1 = lax.conv_dimension_numbers(xc.shape, w1.shape, ('NCH', 'OIH', 'NCH'))
    h = lax.conv_general_dilated(xc, w1, (1,), ((1, 1),), dimension_numbers=dn1,
                                 precision=lax.Precision.HIGHEST)
    h = jnp.maximum(h + b1[None, :, None], 0.0)
    if quantized:
        h = h.astype(jnp.bfloat16).astype(jnp.float32)
    dn2 = lax.conv_dimension_numbers(h.shape, w2.shape, ('NCH', 'OIH', 'NCH'))
    h = lax.conv_general_dilated(h, w2, (1,), ((1, 1),), dimension_numbers=dn2,
                                 precision=lax.Precision.HIGHEST)
    h = jnp.maximum(h + b2[None, :, None], 0.0)
    return jnp.transpose(h, (0, 2, 1))                                     # (B, T, D)


if __name__ == "__main__":
    B, T, C, D = 2, 32, 4, 32   # batch, seq, n_channels, d_model (small; T=32 -> 2 time tiles)

    key = jax.random.PRNGKey(0)
    kx, k1, k2, k3, k4 = jax.random.split(key, 5)
    x = jax.random.normal(kx, (B, T, C), dtype=jnp.float32)
    # Conv1d parameter layout: weight (out, in, kernel), bias (out,)
    w1 = 0.2 * jax.random.normal(k1, (D, C, 3), dtype=jnp.float32)
    b1 = 0.1 * jax.random.normal(k2, (D,), dtype=jnp.float32)
    w2 = 0.2 * jax.random.normal(k3, (D, D, 3), dtype=jnp.float32)
    b2 = 0.1 * jax.random.normal(k4, (D,), dtype=jnp.float32)

    # tile_t=16 deliberately keeps the toy T=32 on the multi-tile edge/halo path (grid=(2,2));
    # production sizes are picked automatically from Dp and the device's VMEM capacity.
    out = encoder_forward(x, w1, b1, w2, b2, tile_t=16)
    out = jax.block_until_ready(out)
    assert out.shape == (B, T, D)
    out_f = out.astype(jnp.float32)

    # Tight check vs a reference that mirrors the kernel's bf16 rounding (operands, hidden, output).
    ref_q = encoder_ref(x, w1, b1, w2, b2, quantized=True)
    ref_q = jax.block_until_ready(ref_q.astype(jnp.bfloat16).astype(jnp.float32))
    assert jnp.allclose(out_f, ref_q, atol=3e-2, rtol=3e-2), "mismatch vs bf16-consistent reference"

    # Loose check vs the full-precision (PyTorch-semantics) reference (bf16 rounding noise only).
    ref_f = jax.block_until_ready(encoder_ref(x, w1, b1, w2, b2))
    assert jnp.allclose(out_f, ref_f, atol=1e-1, rtol=1e-1), "mismatch vs f32 reference"

    print("KERNEL_OK")
</pallas_src>

<mosaic_0001>
module attributes {stable_mosaic.version = 11 : i64} {
  func.func @_encoder_kernel(%arg0: i32, %arg1: i32, %arg2: memref<1x16x12xbf16, #tpu.memory_space<vmem>>, %arg3: memref<1x1x2x12xbf16, #tpu.memory_space<vmem>>, %arg4: memref<12x128xbf16, #tpu.memory_space<vmem>>, %arg5: memref<1x128xf32, #tpu.memory_space<vmem>>, %arg6: memref<3x128x128xbf16, #tpu.memory_space<vmem>>, %arg7: memref<1x128xf32, #tpu.memory_space<vmem>>, %arg8: memref<1x16x128xbf16, #tpu.memory_space<vmem>>) attributes {dimension_semantics = [#tpu.dimension_semantics<parallel>, #tpu.dimension_semantics<parallel>], iteration_bounds = array<i64: 2, 2>, scalar_prefetch = 0 : i64, scratch_operands = 0 : i64, tpu.core_type = #tpu.core_type<tc>, window_params = [{transform_indices = @transform_0, window_bounds = array<i64: 1, 16, 12>}, {transform_indices = @transform_1, window_bounds = array<i64: 1, 1, 2, 12>}, {pipeline_mode = #tpu.pipeline_mode<synchronous>, transform_indices = @transform_2, window_bounds = array<i64: 12, 128>}, {pipeline_mode = #tpu.pipeline_mode<synchronous>, transform_indices = @transform_3, window_bounds = array<i64: 1, 128>}, {pipeline_mode = #tpu.pipeline_mode<synchronous>, transform_indices = @transform_4, window_bounds = array<i64: 3, 128, 128>}, {pipeline_mode = #tpu.pipeline_mode<synchronous>, transform_indices = @transform_5, window_bounds = array<i64: 1, 128>}, {transform_indices = @transform_6, window_bounds = array<i64: 1, 16, 128>}]} {
    %c0 = arith.constant 0 : index
    %c0_0 = arith.constant 0 : index
    %0 = vector.load %arg4[%c0, %c0_0] : memref<12x128xbf16, #tpu.memory_space<vmem>>, vector<12x128xbf16>
    %c0_1 = arith.constant 0 : index
    %c0_2 = arith.constant 0 : index
    %1 = vector.load %arg5[%c0_1, %c0_2] : memref<1x128xf32, #tpu.memory_space<vmem>>, vector<1x128xf32>
    %c0_3 = arith.constant 0 : index
    %c0_4 = arith.constant 0 : index
    %2 = vector.load %arg7[%c0_3, %c0_4] : memref<1x128xf32, #tpu.memory_space<vmem>>, vector<1x128xf32>
    %c0_5 = arith.constant 0 : index
    %c0_6 = arith.constant 0 : index
    %c0_7 = arith.constant 0 : index
    %3 = vector.load %arg2[%c0_5, %c0_6, %c0_7] : memref<1x16x12xbf16, #tpu.memory_space<vmem>>, vector<1x16x12xbf16>
    %4 = vector.shape_cast %3 : vector<1x16x12xbf16> to vector<16x12xbf16>
    %cst = arith.constant dense<0.000000e+00> : vector<16x128xf32>
    %5 = tpu.matmul %4, %0, %cst {dimension_numbers = #tpu.dot_dimension_numbers<[1], [0], [0], [1], [0, 0, 1, 1], [], []>} : vector<16x12xbf16>, vector<12x128xbf16>, vector<16x128xf32> -> vector<16x128xf32>
    %6 = vector.broadcast %1 : vector<1x128xf32> to vector<16x128xf32>
    %7 = arith.addf %5, %6 : vector<16x128xf32>
    %cst_8 = arith.constant 0.000000e+00 : f32
    %8 = vector.broadcast %cst_8 : f32 to vector<16x128xf32>
    %9 = arith.maximumf %7, %8 : vector<16x128xf32>
    %c0_9 = arith.constant 0 : index
    %c0_10 = arith.constant 0 : index
    %c0_11 = arith.constant 0 : index
    %c0_12 = arith.constant 0 : index
    %10 = vector.load %arg3[%c0_9, %c0_10, %c0_11, %c0_12] : memref<1x1x2x12xbf16, #tpu.memory_space<vmem>>, vector<1x1x2x12xbf16>
    %11 = vector.shape_cast %10 : vector<1x1x2x12xbf16> to vector<2x12xbf16>
    %cst_13 = arith.constant dense<0.000000e+00> : vector<2x128xf32>
    %12 = tpu.matmul %11, %0, %cst_13 {dimension_numbers = #tpu.dot_dimension_numbers<[1], [0], [0], [1], [0, 0, 1, 1], [], []>} : vector<2x12xbf16>, vector<12x128xbf16>, vector<2x128xf32> -> vector<2x128xf32>
    %13 = vector.broadcast %1 : vector<1x128xf32> to vector<2x128xf32>
    %14 = arith.addf %12, %13 : vector<2x128xf32>
    %cst_14 = arith.constant 0.000000e+00 : f32
    %15 = vector.broadcast %cst_14 : f32 to vector<2x128xf32>
    %16 = arith.maximumf %14, %15 : vector<2x128xf32>
    %c0_i32 = arith.constant 0 : i32
    %17 = arith.cmpi eq, %arg1, %c0_i32 : i32
    %18 = vector.extract_strided_slice %16 {offsets = [0, 0], sizes = [1, 128], strides = [1, 1]} : vector<2x128xf32> to vector<1x128xf32>
    %cst_15 = arith.constant 0.000000e+00 : f32
    %19 = vector.broadcast %cst_15 : f32 to vector<1x128xf32>
    %20 = arith.select %17, %19, %18 : vector<1x128xf32>
    %c1_i32 = arith.constant 1 : i32
    %21 = arith.cmpi eq, %arg1, %c1_i32 : i32
    %22 = vector.extract_strided_slice %16 {offsets = [1, 0], sizes = [1, 128], strides = [1, 1]} : vector<2x128xf32> to vector<1x128xf32>
    %cst_16 = arith.constant 0.000000e+00 : f32
    %23 = vector.broadcast %cst_16 : f32 to vector<1x128xf32>
    %24 = arith.select %21, %23, %22 : vector<1x128xf32>
    %25 = arith.truncf %9 : vector<16x128xf32> to vector<16x128xbf16>
    %26 = arith.truncf %20 : vector<1x128xf32> to vector<1x128xbf16>
    %27 = vector.extract_strided_slice %25 {offsets = [0, 0], sizes = [15, 128], strides = [1, 1]} : vector<16x128xbf16> to vector<15x128xbf16>
    %28 = tpu.concatenate %26, %27 in 0 : vector<1x128xbf16>, vector<15x128xbf16> -> vector<16x128xbf16>
    %29 = vector.extract_strided_slice %25 {offsets = [1, 0], sizes = [15, 128], strides = [1, 1]} : vector<16x128xbf16> to vector<15x128xbf16>
    %30 = arith.truncf %24 : vector<1x128xf32> to vector<1x128xbf16>
    %31 = tpu.concatenate %29, %30 in 0 : vector<15x128xbf16>, vector<1x128xbf16> -> vector<16x128xbf16>
    %c0_17 = arith.constant 0 : index
    %c0_18 = arith.constant 0 : index
    %c0_19 = arith.constant 0 : index
    %32 = vector.load %arg6[%c0_17, %c0_18, %c0_19] : memref<3x128x128xbf16, #tpu.memory_space<vmem>>, vector<1x128x128xbf16>
    %33 = vector.shape_cast %32 : vector<1x128x128xbf16> to vector<128x128xbf16>
    %cst_20 = arith.constant dense<0.000000e+00> : vector<16x128xf32>
    %34 = tpu.matmul %28, %33, %cst_20 {dimension_numbers = #tpu.dot_dimension_numbers<[1], [0], [0], [1], [0, 0, 1, 1], [], []>} : vector<16x128xbf16>, vector<128x128xbf16>, vector<16x128xf32> -> vector<16x128xf32>
    %c1 = arith.constant 1 : index
    %c0_21 = arith.constant 0 : index
    %c0_22 = arith.constant 0 : index
    %35 = vector.load %arg6[%c1, %c0_21, %c0_22] : memref<3x128x128xbf16, #tpu.memory_space<vmem>>, vector<1x128x128xbf16>
    %36 = vector.shape_cast %35 : vector<1x128x128xbf16> to vector<128x128xbf16>
    %cst_23 = arith.constant dense<0.000000e+00> : vector<16x128xf32>
    %37 = tpu.matmul %25, %36, %cst_23 {dimension_numbers = #tpu.dot_dimension_numbers<[1], [0], [0], [1], [0, 0, 1, 1], [], []>} : vector<16x128xbf16>, vector<128x128xbf16>, vector<16x128xf32> -> vector<16x128xf32>
    %38 = arith.addf %34, %37 : vector<16x128xf32>
    %c2 = arith.constant 2 : index
    %c0_24 = arith.constant 0 : index
    %c0_25 = arith.constant 0 : index
    %39 = vector.load %arg6[%c2, %c0_24, %c0_25] : memref<3x128x128xbf16, #tpu.memory_space<vmem>>, vector<1x128x128xbf16>
    %40 = vector.shape_cast %39 : vector<1x128x128xbf16> to vector<128x128xbf16>
    %cst_26 = arith.constant dense<0.000000e+00> : vector<16x128xf32>
    %41 = tpu.matmul %31, %40, %cst_26 {dimension_numbers = #tpu.dot_dimension_numbers<[1], [0], [0], [1], [0, 0, 1, 1], [], []>} : vector<16x128xbf16>, vector<128x128xbf16>, vector<16x128xf32> -> vector<16x128xf32>
    %42 = arith.addf %38, %41 : vector<16x128xf32>
    %43 = vector.broadcast %2 : vector<1x128xf32> to vector<16x128xf32>
    %44 = arith.addf %42, %43 : vector<16x128xf32>
    %cst_27 = arith.constant 0.000000e+00 : f32
    %45 = vector.broadcast %cst_27 : f32 to vector<16x128xf32>
    %46 = arith.maximumf %44, %45 : vector<16x128xf32>
    %47 = arith.truncf %46 : vector<16x128xf32> to vector<16x128xbf16>
    %c0_28 = arith.constant 0 : index
    %c0_29 = arith.constant 0 : index
    %c0_30 = arith.constant 0 : index
    %48 = vector.load %arg8[%c0_28, %c0_29, %c0_30] : memref<1x16x128xbf16, #tpu.memory_space<vmem>>, vector<1x16x128xbf16>
    %49 = vector.shape_cast %48 : vector<1x16x128xbf16> to vector<16x128xbf16>
    %50 = vector.shape_cast %47 : vector<16x128xbf16> to vector<1x16x128xbf16>
    tpu.vector_store %arg8[%c0_28, %c0_29, %c0_30], %50 {strides = array<i32>} : memref<1x16x128xbf16, #tpu.memory_space<vmem>>, vector<1x16x128xbf16>,
    return
  }
  func.func @transform_0(%arg0: i32, %arg1: i32) -> (i32, i32, i32) {
    %c0_i32 = arith.constant 0 : i32
    %c0_i32_0 = arith.constant 0 : i32
    return %arg0, %arg1, %c0_i32 : i32, i32, i32
  }
  func.func @transform_1(%arg0: i32, %arg1: i32) -> (i32, i32, i32, i32) {
    %c0_i32 = arith.constant 0 : i32
    %c0_i32_0 = arith.constant 0 : i32
    %c0_i32_1 = arith.constant 0 : i32
    return %arg0, %arg1, %c0_i32, %c0_i32_0 : i32, i32, i32, i32
  }
  func.func @transform_2(%arg0: i32, %arg1: i32) -> (i32, i32) {
    %c0_i32 = arith.constant 0 : i32
    %c0_i32_0 = arith.constant 0 : i32
    %c0_i32_1 = arith.constant 0 : i32
    return %c0_i32, %c0_i32_0 : i32, i32
  }
  func.func @transform_3(%arg0: i32, %arg1: i32) -> (i32, i32) {
    %c0_i32 = arith.constant 0 : i32
    %c0_i32_0 = arith.constant 0 : i32
    %c0_i32_1 = arith.constant 0 : i32
    return %c0_i32, %c0_i32_0 : i32, i32
  }
  func.func @transform_4(%arg0: i32, %arg1: i32) -> (i32, i32, i32) {
    %c0_i32 = arith.constant 0 : i32
    %c0_i32_0 = arith.constant 0 : i32
    %c0_i32_1 = arith.constant 0 : i32
    %c0_i32_2 = arith.constant 0 : i32
    return %c0_i32, %c0_i32_0, %c0_i32_1 : i32, i32, i32
  }
  func.func @transform_5(%arg0: i32, %arg1: i32) -> (i32, i32) {
    %c0_i32 = arith.constant 0 : i32
    %c0_i32_0 = arith.constant 0 : i32
    %c0_i32_1 = arith.constant 0 : i32
    return %c0_i32, %c0_i32_0 : i32, i32
  }
  func.func @transform_6(%arg0: i32, %arg1: i32) -> (i32, i32, i32) {
    %c0_i32 = arith.constant 0 : i32
    %c0_i32_0 = arith.constant 0 : i32
    return %arg0, %arg1, %c0_i32 : i32, i32, i32
  }
}

</mosaic_0001>

<llo_original>
// kernel: tpu_custom_call.1
$region0: #{tpu_custom_call.1}
  #allocation0 [shape = 'u32[]', space=smem, size = 0x4, offset = 0x4, fixed_abs, tag = 'smem constant byte address 0x4 - core index']
  #allocation1 [shape = 'u32[144,128]{1,0:T(1,128)}', space=vmem, size = 0x12000, scoped, tag = 'internal scratch']
  %s0 = inlined_call_operand.vmem [shape: bf16[2,32,12], index: 0, kind: input, shape index: {}]
  %s1 = inlined_call_operand.vmem [shape: bf16[2,2,2,12], index: 1, kind: input, shape index: {}]
  %s2 = inlined_call_operand.vmem [shape: bf16[12,128], index: 2, kind: input, shape index: {}]
  %s3 = inlined_call_operand.vmem [shape: f32[1,128], index: 3, kind: input, shape index: {}]
  %s4 = inlined_call_operand.hbm [shape: bf16[3,128,128], index: 4, kind: input, shape index: {}]
  %s5 = inlined_call_operand.vmem [shape: f32[1,128], index: 5, kind: input, shape index: {}]
  %s6 = inlined_call_operand.hbm [shape: bf16[2,32,128], index: 6, kind: output, shape index: {}]
  %s7 = sld [smem:[#allocation0]]
  $region61: #{tpu_custom_call.1} parent=0
    _
  %s9 = ssub.s32 1, %s7
  %s10 = scalar_select 0, %s9, %s7
  $region1: #{tpu_custom_call.1} parent=0
    #allocation2 [shape = 'u8[98304]{0}', space=vmem, size = 0x18000, scoped, tag = 'input window, operand 4, single buffered']
    #allocation3 [shape = 's32[2]{0}', space=sflag, size = 0x8, scoped, tag = 'scoped memory for tpu_custom_call.1']
    #allocation4 [shape = 's32[2]{0}', space=sflag, size = 0x8, scoped, tag = 'scoped memory for tpu_custom_call.1']
    #allocation5 [shape = 'u8[8192]{0}', space=vmem, size = 0x2000, scoped, tag = 'output window, operand 0']
    %11 = vsyncpa [#allocation3], 0
    %12 = vsyncpa [#allocation4], 0
    %s13 = scalar_lea.sflag [#allocation4], 1
    %14 = vsyncpa %s13, 0
    loop: start=0, step=1, limit=6
    $region2: #{tpu_custom_call.1} parent=1 // loop_pre_header
      _
    $region3: #{tpu_custom_call.1} parent=1 // loop_header
      %s16 = sphi 0, %s20
      %p17 = scmp.ge.s32.totalorder %s16, 6
      %s23 = sphi 0, %s35
      %s24 = sphi 0, %s31
      %s25 = sphi 0, %s23
      %s26 = sphi 0, %s24
      %s27 = sphi 0, %s25
      %s28 = sphi 0, %s26
      %s40 = sphi 0, %s42
      %s43 = sphi 0, %s40
      %s44 = sphi 0, %s43
      %s60 = sphi 0, %s44
      %s68 = sphi 0, %s70
      %s71 = sphi 0, %s68
      %s72 = sphi 0, %s71
      %s88 = sphi 0, %s72
      %s92 = sphi 0, %s92
      %s94 = sphi 0, %s92
      %s95 = sphi 0, %s94
      %s109 = sphi 0, %s95
      %s113 = sphi 0, %s113
      %s115 = sphi 0, %s113
      %s116 = sphi 0, %s115
      %s130 = sphi 0, %s116
      %s134 = sphi 0, %s134
      %s136 = sphi 0, %s134
      %s137 = sphi 0, %s136
      %s151 = sphi 0, %s137
      %s155 = sphi 0, %s155
      %s157 = sphi 0, %s155
      %s158 = sphi 0, %s157
      %s172 = sphi 0, %s158
      %s180 = sphi 0, %s182
      %s183 = sphi 0, %s180
      %s184 = sphi 0, %s183
      %s200 = sphi 0, %s184
    $region4: #{tpu_custom_call.1} parent=1 // loop_header_branch
      %19 = sbr.rel (%p17) target = $region8
    $region5: #{tpu_custom_call.1} parent=1 // loop_body
      %s21 = ssub.s32 %s16, 1
      %s22 = ssub.s32 %s16, 2
      %s29 = sadd.s32 1, %s24
      %p30 = scmp.ge.s32.totalorder %s29, 2
      %s31 = scalar_select %p30, 0, %s29
      %s32 = sadd.s32 1, %s23
      %s33 = scalar_select %p30, %s32, %s23
      %p34 = scmp.ge.s32.totalorder %s33, 2
      %s35 = scalar_select %p34, 0, %s33
      %s36 = ssub.s32 %s23, %s35
      %s37 = ssub.s32 %s24, %s31
      %s38 = sor.u32 %s36, %s37
      %p39 = scmp.eq.s32.totalorder %s38, 0
      %s41 = sadd.s32 %s40, 1
      %s42 = scalar_select %p39, %s40, %s41
      %p45 = pneg %p39
      %p46 = scmp.eq.s32.totalorder %s16, 3
      %p47 = por %p45, %p46
      %p48 = scmp.ne.s32.totalorder %s40, %s43
      %p49 = scmp.eq.s32.totalorder %s16, 0
      %p50 = por %p48, %p49
      %p51 = scmp.ne.s32.totalorder %s40, %s43
      %p52 = scmp.eq.s32.totalorder %s21, 3
      %p53 = por %p51, %p52
      %p54 = scmp.ne.s32.totalorder %s43, %s44
      %p55 = scmp.eq.s32.totalorder %s21, 0
      %p56 = por %p54, %p55
      %p57 = scmp.ne.s32.totalorder %s43, %s44
      %p58 = scmp.eq.s32.totalorder %s22, 3
      %p59 = por %p57, %p58
      %p61 = scmp.ne.s32.totalorder %s44, %s60
      %p62 = scmp.eq.s32.totalorder %s22, 0
      %p63 = por %p61, %p62
      %s64 = ssub.s32 %s23, %s35
      %s65 = ssub.s32 %s24, %s31
      %s66 = sor.u32 %s64, %s65
      %p67 = scmp.eq.s32.totalorder %s66, 0
      %s69 = sadd.s32 %s68, 1
      %s70 = scalar_select %p67, %s68, %s69
      %p73 = pneg %p67
      %p74 = scmp.eq.s32.totalorder %s16, 3
      %p75 = por %p73, %p74
      %p76 = scmp.ne.s32.totalorder %s68, %s71
      %p77 = scmp.eq.s32.totalorder %s16, 0
      %p78 = por %p76, %p77
      %p79 = scmp.ne.s32.totalorder %s68, %s71
      %p80 = scmp.eq.s32.totalorder %s21, 3
      %p81 = por %p79, %p80
      %p82 = scmp.ne.s32.totalorder %s71, %s72
      %p83 = scmp.eq.s32.totalorder %s21, 0
      %p84 = por %p82, %p83
      %p85 = scmp.ne.s32.totalorder %s71, %s72
      %p86 = scmp.eq.s32.totalorder %s22, 3
      %p87 = por %p85, %p86
      %p89 = scmp.ne.s32.totalorder %s72, %s88
      %p90 = scmp.eq.s32.totalorder %s22, 0
      %p91 = por %p89, %p90
      %s93 = sadd.s32 %s92, 1
      %p96 = scmp.eq.s32.totalorder %s16, 3
      %p97 = scmp.ne.s32.totalorder %s92, %s94
      %p98 = scmp.eq.s32.totalorder %s16, 0
      %p99 = por %p97, %p98
      %p100 = scmp.ne.s32.totalorder %s92, %s94
      %p101 = scmp.eq.s32.totalorder %s21, 3
      %p102 = por %p100, %p101
      %p103 = scmp.ne.s32.totalorder %s94, %s95
      %p104 = scmp.eq.s32.totalorder %s21, 0
      %p105 = por %p103, %p104
      %p106 = scmp.ne.s32.totalorder %s94, %s95
      %p107 = scmp.eq.s32.totalorder %s22, 3
      %p108 = por %p106, %p107
      %p110 = scmp.ne.s32.totalorder %s95, %s109
      %p111 = scmp.eq.s32.totalorder %s22, 0
      %p112 = por %p110, %p111
      %s114 = sadd.s32 %s113, 1
      %p117 = scmp.eq.s32.totalorder %s16, 3
      %p118 = scmp.ne.s32.totalorder %s113, %s115
      %p119 = scmp.eq.s32.totalorder %s16, 0
      %p120 = por %p118, %p119
      %p121 = scmp.ne.s32.totalorder %s113, %s115
      %p122 = scmp.eq.s32.totalorder %s21, 3
      %p123 = por %p121, %p122
      %p124 = scmp.ne.s32.totalorder %s115, %s116
      %p125 = scmp.eq.s32.totalorder %s21, 0
      %p126 = por %p124, %p125
      %p127 = scmp.ne.s32.totalorder %s115, %s116
      %p128 = scmp.eq.s32.totalorder %s22, 3
      %p129 = por %p127, %p128
      %p131 = scmp.ne.s32.totalorder %s116, %s130
      %p132 = scmp.eq.s32.totalorder %s22, 0
      %p133 = por %p131, %p132
      %s135 = sadd.s32 %s134, 1
      %p138 = scmp.eq.s32.totalorder %s16, 3
      %p139 = scmp.ne.s32.totalorder %s134, %s136
      %p140 = scmp.eq.s32.totalorder %s16, 0
      %p141 = por %p139, %p140
      %p142 = scmp.ne.s32.totalorder %s134, %s136
      %p143 = scmp.eq.s32.totalorder %s21, 3
      %p144 = por %p142, %p143
      %p145 = scmp.ne.s32.totalorder %s136, %s137
      %p146 = scmp.eq.s32.totalorder %s21, 0
      %p147 = por %p145, %p146
      %p148 = scmp.ne.s32.totalorder %s136, %s137
      %p149 = scmp.eq.s32.totalorder %s22, 3
      %p150 = por %p148, %p149
      %p152 = scmp.ne.s32.totalorder %s137, %s151
      %p153 = scmp.eq.s32.totalorder %s22, 0
      %p154 = por %p152, %p153
      %s156 = sadd.s32 %s155, 1
      %p159 = scmp.eq.s32.totalorder %s16, 3
      %p160 = scmp.ne.s32.totalorder %s155, %s157
      %p161 = scmp.eq.s32.totalorder %s16, 0
      %p162 = por %p160, %p161
      %p163 = scmp.ne.s32.totalorder %s155, %s157
      %p164 = scmp.eq.s32.totalorder %s21, 3
      %p165 = por %p163, %p164
      %p166 = scmp.ne.s32.totalorder %s157, %s158
      %p167 = scmp.eq.s32.totalorder %s21, 0
      %p168 = por %p166, %p167
      %p169 = scmp.ne.s32.totalorder %s157, %s158
      %p170 = scmp.eq.s32.totalorder %s22, 3
      %p171 = por %p169, %p170
      %p173 = scmp.ne.s32.totalorder %s158, %s172
      %p174 = scmp.eq.s32.totalorder %s22, 0
      %p175 = por %p173, %p174
      %s176 = ssub.s32 %s23, %s35
      %s177 = ssub.s32 %s24, %s31
      %s178 = sor.u32 %s176, %s177
      %p179 = scmp.eq.s32.totalorder %s178, 0
      %s181 = sadd.s32 %s180, 1
      %s182 = scalar_select %p179, %s180, %s181
      %p185 = pneg %p179
      %p186 = scmp.eq.s32.totalorder %s16, 3
      %p187 = por %p185, %p186
      %p188 = scmp.ne.s32.totalorder %s180, %s183
      %p189 = scmp.eq.s32.totalorder %s16, 0
      %p190 = por %p188, %p189
      %p191 = scmp.ne.s32.totalorder %s180, %s183
      %p192 = scmp.eq.s32.totalorder %s21, 3
      %p193 = por %p191, %p192
      %p194 = scmp.ne.s32.totalorder %s183, %s184
      %p195 = scmp.eq.s32.totalorder %s21, 0
      %p196 = por %p194, %p195
      %p197 = scmp.ne.s32.totalorder %s183, %s184
      %p198 = scmp.eq.s32.totalorder %s22, 3
      %p199 = por %p197, %p198
      %p201 = scmp.ne.s32.totalorder %s184, %s200
      %p202 = scmp.eq.s32.totalorder %s22, 0
      %p203 = por %p201, %p202
      %p204 = scmp.le.s32.totalorder 1, %s16
      %p205 = scmp.lt.s32.totalorder %s16, 5
      %p206 = pnand %p204, %p205
      %p207 = pneg %p206
      // Predicated region
      $region9: #{tpu_custom_call.1} parent=5 // pred_check
        _
      $region10: #{tpu_custom_call.1} parent=5 // pred_check_branch
        %209 = sbr.rel (%p206) target = $region12
      $region11: #{tpu_custom_call.1} parent=5 // pred_region
        %s210 = ssub.s32 %s16, 1
        // Predicated region
        $region13: #{tpu_custom_call.1} parent=11 // pred_check
          %p211 = pneg %p105
        $region14: #{tpu_custom_call.1} parent=11 // pred_check_branch
          %213 = sbr.rel (%p211) target = $region16
        $region15: #{tpu_custom_call.1} parent=11 // pred_region
          _
        $region16: #{tpu_custom_call.1} parent=11 // pred_fallthru
          _
        // Predicated region
        $region17: #{tpu_custom_call.1} parent=11 // pred_check
          %p214 = pneg %p126
        $region18: #{tpu_custom_call.1} parent=11 // pred_check_branch
          %216 = sbr.rel (%p214) target = $region20
        $region19: #{tpu_custom_call.1} parent=11 // pred_region
          _
        $region20: #{tpu_custom_call.1} parent=11 // pred_fallthru
          _
        // Predicated region
        $region21: #{tpu_custom_call.1} parent=11 // pred_check
          %p217 = pneg %p147
        $region22: #{tpu_custom_call.1} parent=11 // pred_check_branch
          %219 = sbr.rel (%p217) target = $region24
        $region23: #{tpu_custom_call.1} parent=11 // pred_region
          %s221 = ssub.s32 3072, 3072
          %222 = vsyncadd [#allocation3], %s221
          %s223 = sshll.u32 [#allocation2], 4
          %s224 = int_to_ptr.vmem [resolvable:$true] %s223
          %229 = dma.hbm_to_vmem [thread:$0]  %s4, 3072, %s224, [#allocation3], 64, 64, 4
        $region24: #{tpu_custom_call.1} parent=11 // pred_fallthru
          _
        // Predicated region
        $region25: #{tpu_custom_call.1} parent=11 // pred_check
          %p230 = pneg %p168
        $region26: #{tpu_custom_call.1} parent=11 // pred_check_branch
          %232 = sbr.rel (%p230) target = $region28
        $region27: #{tpu_custom_call.1} parent=11 // pred_region
          _
        $region28: #{tpu_custom_call.1} parent=11 // pred_fallthru
          _
      $region12: #{tpu_custom_call.1} parent=5 // pred_fallthru
        _
      %p233 = scmp.lt.s32.totalorder %s16, 4
      // Predicated region
      $region29: #{tpu_custom_call.1} parent=5 // pred_check
        %p234 = pneg %p233
      $region30: #{tpu_custom_call.1} parent=5 // pred_check_branch
        %236 = sbr.rel (%p234) target = $region32
      $region31: #{tpu_custom_call.1} parent=5 // pred_region
        // Predicated region
        $region33: #{tpu_custom_call.1} parent=31 // pred_check
          %p237 = pneg %p50
        $region34: #{tpu_custom_call.1} parent=31 // pred_check_branch
          %239 = sbr.rel (%p237) target = $region36
        $region35: #{tpu_custom_call.1} parent=31 // pred_region
          %s240 = smul.u32 2, %s24
          %p241 = scmp.lt.s32.totalorder %s23, 1
          %s242 = scalar_select %p241, %s23, 1
          %p243 = scmp.lt.s32.totalorder %s240, 3
          %s244 = scalar_select %p243, %s240, 3
          %s245 = smul.addr %s242, 4
          %s246 = sadd.s32 %s244, %s245
          %s247 = smul.addr %s246, 4
          %s248 = scalar_lea.vmem %s0, %s247
          %s249 = smul.u32 2, %s24
        $region36: #{tpu_custom_call.1} parent=31 // pred_fallthru
          _
        // Predicated region
        $region37: #{tpu_custom_call.1} parent=31 // pred_check
          %p250 = pneg %p78
        $region38: #{tpu_custom_call.1} parent=31 // pred_check_branch
          %252 = sbr.rel (%p250) target = $region40
        $region39: #{tpu_custom_call.1} parent=31 // pred_region
          %p253 = scmp.lt.s32.totalorder %s23, 1
          %s254 = scalar_select %p253, %s23, 1
          %p255 = scmp.lt.s32.totalorder %s24, 1
          %s256 = scalar_select %p255, %s24, 1
          %s257 = smul.addr %s254, 2
          %s258 = sadd.s32 %s256, %s257
          %s259 = scalar_lea.vmem %s1, %s258
        $region40: #{tpu_custom_call.1} parent=31 // pred_fallthru
          _
      $region32: #{tpu_custom_call.1} parent=5 // pred_fallthru
        _
      %p260 = scmp.le.s32.totalorder 1, %s16
      %p261 = scmp.lt.s32.totalorder %s16, 5
      %p262 = pnand %p260, %p261
      %p263 = pneg %p262
      // Predicated region
      $region41: #{tpu_custom_call.1} parent=5 // pred_check
        _
      $region42: #{tpu_custom_call.1} parent=5 // pred_check_branch
        %265 = sbr.rel (%p262) target = $region44
      $region43: #{tpu_custom_call.1} parent=5 // pred_region
        %s266 = ssub.s32 %s16, 1
        // Predicated region
        $region45: #{tpu_custom_call.1} parent=43 // pred_check
          %p267 = pneg %p147
        $region46: #{tpu_custom_call.1} parent=43 // pred_check_branch
          %269 = sbr.rel (%p267) target = $region48
        $region47: #{tpu_custom_call.1} parent=43 // pred_region
          %270 = dma.done [#allocation3], 3072
        $region48: #{tpu_custom_call.1} parent=43 // pred_fallthru
          _
        %s271 = smul.u32 2, %s26
        %p272 = scmp.lt.s32.totalorder %s25, 1
        %s273 = scalar_select %p272, %s25, 1
        %p274 = scmp.lt.s32.totalorder %s271, 3
        %s275 = scalar_select %p274, %s271, 3
        %s276 = smul.addr %s273, 4
        %s277 = sadd.s32 %s275, %s276
        %s278 = smul.addr %s277, 4
        %s279 = scalar_lea.vmem %s0, %s278
        %p280 = pneg %p56
        %p281 = pneg %p53
        %p282 = scmp.lt.s32.totalorder %s25, 1
        %s283 = scalar_select %p282, %s25, 1
        %p284 = scmp.lt.s32.totalorder %s26, 1
        %s285 = scalar_select %p284, %s26, 1
        %s286 = smul.addr %s283, 2
        %s287 = sadd.s32 %s285, %s286
        %s288 = scalar_lea.vmem %s1, %s287
        %p289 = pneg %p84
        %p290 = pneg %p81
        %p291 = pneg %p105
        %p292 = pneg %p102
        %p293 = pneg %p126
        %p294 = pneg %p123
        %p295 = pneg %p147
        %p296 = pneg %p144
        %p297 = pneg %p168
        %p298 = pneg %p165
        %p299 = pneg %p196
        %p300 = pneg %p193
        %s301 = sand.u32 %s183, 1
        %s302 = scalar_lea.sflag [#allocation4], %s301
        %s303 = sand.u32 %s183, 1
        %s304 = smul.addr %s303, 8
        %s305 = scalar_lea.vmem [#allocation5], %s304
        %s306 = smul.u32 2, %s26
        %p307 = scmp.lt.s32.totalorder %s25, 1
        %s308 = scalar_select %p307, %s25, 1
        %p309 = scmp.lt.s32.totalorder %s306, 3
        %s310 = scalar_select %p309, %s306, 3
        %s311 = smul.addr %s308, 4
        %s312 = sadd.s32 %s310, %s311
        %s313 = smul.addr %s312, 4
        %s314 = scalar_lea.vmem %s0, %s313
        %s315 = smul.u32 2, %s26
        %p316 = scmp.lt.s32.totalorder %s25, 1
        %s317 = scalar_select %p316, %s25, 1
        %p318 = scmp.lt.s32.totalorder %s26, 1
        %s319 = scalar_select %p318, %s26, 1
        %s320 = smul.addr %s317, 2
        %s321 = sadd.s32 %s319, %s320
        %s322 = scalar_lea.vmem %s1, %s321
        %s323 = smul.u32 2, %s26
        %v325 = vld [vmem:[%s2] sm:$0xf]
        %v326 = vld [vmem:[%s2 + $0x4] sm:$0x3]
        %v327 = vld [vmem:[%s3] sm:$0x1]
        %v328 = vld [vmem:[%s5] sm:$0x1]
        %v329 = vld [vmem:[%s314] sm:$0xf]
        %v330 = vld [vmem:[%s314 + $0x4] sm:$0xf]
        %v332 = vlaneseq
        %v333 = vshrl.u32 %v332, 7
        %v334 = vsub.s32 0, %v333
        %v335 = vrot.slane %v327, %v334
        %v339 = vunpack.c.l.b16 %v329
        %v340 = vunpack.c.l.b16 %v330
        %v341 = vpack.c.b16 %v340, %v339
        %v344 = vunpack.c.l.b16 %v325
        %v345 = vunpack.c.l.b16 %v326
        %v346 = vpack.c.b16 %v345, %v344
        %vm347 = vcmask 97280
        %v349 = vsel %vm347, %v341, 0
        %vm351 = vcmask 1045504
        %v353 = vsel %vm351, %v346, 0
        %355 = vmatprep.subr.bf16.mxu0 0
        %356 = vmatpush1.bf16.msra.mxu0 %v353
        %357 = vmatprep.subr.bf16.mxu0 0
        %358 = vmatpush1.bf16.msra.mxu0 0
        %359 = vmatprep.subr.bf16.mxu0 0
        %360 = vmatpush1.bf16.msra.mxu0 0
        %361 = vmatprep.subr.bf16.mxu0 0
        %362 = vmatpush1.bf16.msra.mxu0 0
        %363 = vmatprep.subr.bf16.mxu0 0
        %364 = vmatpush1.bf16.msra.mxu0 0
        %365 = vmatprep.subr.bf16.mxu0 0
        %366 = vmatpush1.bf16.msra.mxu0 0
        %367 = vmatprep.subr.bf16.mxu0 0
        %368 = vmatpush1.bf16.msra.mxu0 0
        %369 = vmatprep.subr.bf16.mxu0 0
        %370 = vmatpush1.bf16.msra.mxu0 0
        %371 = vmatprep.subr.bf16.mxu0 0
        %372 = vmatpush1.bf16.msra.mxu0 0
        %373 = vmatprep.subr.bf16.mxu0 0
        %374 = vmatpush1.bf16.msra.mxu0 0
        %375 = vmatprep.subr.bf16.mxu0 0
        %376 = vmatpush1.bf16.msra.mxu0 0
        %377 = vmatprep.subr.bf16.mxu0 0
        %378 = vmatpush1.bf16.msra.mxu0 0
        %379 = vmatprep.subr.bf16.mxu0 0
        %380 = vmatpush1.bf16.msra.mxu0 0
        %381 = vmatprep.subr.bf16.mxu0 0
        %382 = vmatpush1.bf16.msra.mxu0 0
        %383 = vmatprep.subr.bf16.mxu0 0
        %384 = vmatpush1.bf16.msra.mxu0 0
        %385 = vmatprep.subr.bf16.mxu0 0
        %386 = vmatpush1.bf16.msra.mxu0 0
        %387 = vmatprep.mubr.bf16.mxu0 0
        %388 = vmatmul.mubr.bf16.gmra.mrb[0].mxu0 %v349
        %v389 = vpop.f32.mrb[0].mxu0
        %v390 = vadd.f32 %v335, %v389
        %v391 = vpop.f32.mrb[0].mxu0
        %v392 = vpop.f32.mrb[0].mxu0
        %v393 = vadd.f32 %v335, %v392
        %v394 = vpop.f32.mrb[0].mxu0
        %395 = vdwg.mxu0
        %v396 = vmax.f32 %v390, 0.0
        %v397 = vmax.f32 %v393, 0.0
        %v398 = vld [vmem:[%s322] sm:$0x1]
        %v400 = vsel %vm347, %v398, 0
        %402 = vmatprep.subr.bf16.mxu0 0
        %403 = vmatpush1.bf16.msra.mxu0 %v353
        %404 = vmatprep.subr.bf16.mxu0 0
        %405 = vmatpush1.bf16.msra.mxu0 0
        %406 = vmatprep.subr.bf16.mxu0 0
        %407 = vmatpush1.bf16.msra.mxu0 0
        %408 = vmatprep.subr.bf16.mxu0 0
        %409 = vmatpush1.bf16.msra.mxu0 0
        %410 = vmatprep.subr.bf16.mxu0 0
        %411 = vmatpush1.bf16.msra.mxu0 0
        %412 = vmatprep.subr.bf16.mxu0 0
        %413 = vmatpush1.bf16.msra.mxu0 0
        %414 = vmatprep.subr.bf16.mxu0 0
        %415 = vmatpush1.bf16.msra.mxu0 0
        %416 = vmatprep.subr.bf16.mxu0 0
        %417 = vmatpush1.bf16.msra.mxu0 0
        %418 = vmatprep.subr.bf16.mxu0 0
        %419 = vmatpush1.bf16.msra.mxu0 0
        %420 = vmatprep.subr.bf16.mxu0 0
        %421 = vmatpush1.bf16.msra.mxu0 0
        %422 = vmatprep.subr.bf16.mxu0 0
        %423 = vmatpush1.bf16.msra.mxu0 0
        %424 = vmatprep.subr.bf16.mxu0 0
        %425 = vmatpush1.bf16.msra.mxu0 0
        %426 = vmatprep.subr.bf16.mxu0 0
        %427 = vmatpush1.bf16.msra.mxu0 0
        %428 = vmatprep.subr.bf16.mxu0 0
        %429 = vmatpush1.bf16.msra.mxu0 0
        %430 = vmatprep.subr.bf16.mxu0 0
        %431 = vmatpush1.bf16.msra.mxu0 0
        %432 = vmatprep.subr.bf16.mxu0 0
        %433 = vmatpush1.bf16.msra.mxu0 0
        %434 = vmatprep.mubr.bf16.mxu0 0
        %435 = vmatmul.mubr.bf16.gmra.mrb[0].mxu0 %v400
        %v436 = vpop.f32.mrb[0].mxu0
        %v437 = vadd.f32 %v335, %v436
        %v438 = vpop.f32.mrb[0].mxu0
        %v439 = vpop.f32.mrb[0].mxu0
        %v440 = vpop.f32.mrb[0].mxu0
        %441 = vdwg.mxu0
        %v442 = vmax.f32 %v437, 0.0
        %p443 = scmp.eq.s32.totalorder %s26, 0
        %s444 = scalar_select %p443, 1, 0
        %v445 = vstv %s444
        %vm446 = vcmp.eq.s32.totalorder %v445, 1
        %v447 = vsel %vm446, 0.0, %v442
        %p448 = scmp.eq.s32.totalorder %s26, 1
        %s449 = scalar_select %p448, 1, 0
        %v450 = vstv %s449
        %vm451 = vcmp.eq.s32.totalorder %v450, 1
        %v452 = vsel %vm451, 0.0, %v442
        %v453 = vpack.c.bf16 %v397, %v396
        %v454 = vpack.c.bf16 %v447, %v447
        %v456 = vshrl.u32 %v453, 16
        %v458 = vrot.slane %v456, 7
        %v459 = vshll.u32 %v453, 16
        %v461 = vor.u32 %v458, %v459
        %vm463 = vcmask 1040384
        %vm464 = vsmask.f32 256
        %vm465 = vmand %vm463, %vm464
        %v466 = vsel %vm465, %v454, %v461
        %v467 = vpack.c.bf16 %v452, %v452
        %v468 = vrot.slane %v459, 1
        %v469 = vor.u32 %v456, %v468
        %v472 = vrot.slane %v467, 1
        %vm474 = vcmask 1047552
        %vm475 = vsmask.f32 7424
        %vm476 = vmand %vm474, %vm475
        %v477 = vsel %vm476, %v469, %v472
        %v478 = vld [vmem:[#allocation2] sm:$0xf]
        %v479 = vld [vmem:[#allocation2 + $0x4] sm:$0xf]
        %v480 = vld [vmem:[#allocation2 + $0x8] sm:$0xf]
        %v481 = vld [vmem:[#allocation2 + $0xc] sm:$0xf]
        %v482 = vld [vmem:[#allocation2 + $0x10] sm:$0xf]
        %v483 = vld [vmem:[#allocation2 + $0x14] sm:$0xf]
        %v484 = vld [vmem:[#allocation2 + $0x18] sm:$0xf]
        %v485 = vld [vmem:[#allocation2 + $0x1c] sm:$0xf]
        %v486 = vld [vmem:[#allocation2 + $0x20] sm:$0xf]
        %v487 = vld [vmem:[#allocation2 + $0x24] sm:$0xf]
        %v488 = vld [vmem:[#allocation2 + $0x28] sm:$0xf]
        %v489 = vld [vmem:[#allocation2 + $0x2c] sm:$0xf]
        %v490 = vld [vmem:[#allocation2 + $0x30] sm:$0xf]
        %v491 = vld [vmem:[#allocation2 + $0x34] sm:$0xf]
        %v492 = vld [vmem:[#allocation2 + $0x38] sm:$0xf]
        %v493 = vld [vmem:[#allocation2 + $0x3c] sm:$0xf]
        %s494 = scalar_lea.vmem [#allocation2], 64
        %v495 = vld [vmem:[%s494] sm:$0xf]
        %v496 = vld [vmem:[%s494 + $0x4] sm:$0xf]
        %v497 = vld [vmem:[%s494 + $0x8] sm:$0xf]
        %v498 = vld [vmem:[%s494 + $0xc] sm:$0xf]
        %v499 = vld [vmem:[%s494 + $0x10] sm:$0xf]
        %v500 = vld [vmem:[%s494 + $0x14] sm:$0xf]
        %v501 = vld [vmem:[%s494 + $0x18] sm:$0xf]
        %v502 = vld [vmem:[%s494 + $0x1c] sm:$0xf]
        %v503 = vld [vmem:[%s494 + $0x20] sm:$0xf]
        %v504 = vld [vmem:[%s494 + $0x24] sm:$0xf]
        %v505 = vld [vmem:[%s494 + $0x28] sm:$0xf]
        %v506 = vld [vmem:[%s494 + $0x2c] sm:$0xf]
        %v507 = vld [vmem:[%s494 + $0x30] sm:$0xf]
        %v508 = vld [vmem:[%s494 + $0x34] sm:$0xf]
        %v509 = vld [vmem:[%s494 + $0x38] sm:$0xf]
        %v510 = vld [vmem:[%s494 + $0x3c] sm:$0xf]
        %v527 = vunpack.c.l.b16 %v495
        %v528 = vunpack.c.l.b16 %v496
        %v529 = vunpack.c.l.b16 %v497
        %v530 = vunpack.c.l.b16 %v498
        %v531 = vunpack.c.l.b16 %v499
        %v532 = vunpack.c.l.b16 %v500
        %v533 = vunpack.c.l.b16 %v501
        %v534 = vunpack.c.l.b16 %v502
        %v535 = vunpack.c.l.b16 %v503
        %v536 = vunpack.c.l.b16 %v504
        %v537 = vunpack.c.l.b16 %v505
        %v538 = vunpack.c.l.b16 %v506
        %v539 = vunpack.c.l.b16 %v507
        %v540 = vunpack.c.l.b16 %v508
        %v541 = vunpack.c.l.b16 %v509
        %v542 = vunpack.c.l.b16 %v510
        %v543 = vpack.c.b16 %v528, %v527
        %v544 = vpack.c.b16 %v530, %v529
        %v545 = vpack.c.b16 %v532, %v531
        %v546 = vpack.c.b16 %v534, %v533
        %v547 = vpack.c.b16 %v536, %v535
        %v548 = vpack.c.b16 %v538, %v537
        %v549 = vpack.c.b16 %v540, %v539
        %v550 = vpack.c.b16 %v542, %v541
        %559 = vmatprep.subr.bf16.mxu0 0
        %560 = vmatpush1.bf16.msra.mxu0 %v543
        %561 = vmatprep.subr.bf16.mxu0 0
        %562 = vmatpush1.bf16.msra.mxu0 %v544
        %563 = vmatprep.subr.bf16.mxu0 0
        %564 = vmatpush1.bf16.msra.mxu0 %v545
        %565 = vmatprep.subr.bf16.mxu0 0
        %566 = vmatpush1.bf16.msra.mxu0 %v546
        %567 = vmatprep.subr.bf16.mxu0 0
        %568 = vmatpush1.bf16.msra.mxu0 %v547
        %569 = vmatprep.subr.bf16.mxu0 0
        %570 = vmatpush1.bf16.msra.mxu0 %v548
        %571 = vmatprep.subr.bf16.mxu0 0
        %572 = vmatpush1.bf16.msra.mxu0 %v549
        %573 = vmatprep.subr.bf16.mxu0 0
        %574 = vmatpush1.bf16.msra.mxu0 %v550
        %575 = vmatprep.subr.bf16.mxu0 0
        %576 = vmatpush1.bf16.msra.mxu0 0
        %577 = vmatprep.subr.bf16.mxu0 0
        %578 = vmatpush1.bf16.msra.mxu0 0
        %579 = vmatprep.subr.bf16.mxu0 0
        %580 = vmatpush1.bf16.msra.mxu0 0
        %581 = vmatprep.subr.bf16.mxu0 0
        %582 = vmatpush1.bf16.msra.mxu0 0
        %583 = vmatprep.subr.bf16.mxu0 0
        %584 = vmatpush1.bf16.msra.mxu0 0
        %585 = vmatprep.subr.bf16.mxu0 0
        %586 = vmatpush1.bf16.msra.mxu0 0
        %587 = vmatprep.subr.bf16.mxu0 0
        %588 = vmatpush1.bf16.msra.mxu0 0
        %589 = vmatprep.subr.bf16.mxu0 0
        %590 = vmatpush1.bf16.msra.mxu0 0
        %591 = vmatprep.mubr.bf16.mxu0 0
        %592 = vmatmul.mubr.bf16.gmra.mrb[0].mxu0 %v453
        %v593 = vpop.f32.mrb[0].mxu0
        %v594 = vadd.f32 0.0, %v593
        %v595 = vpop.f32.mrb[0].mxu0
        %v596 = vpop.f32.mrb[0].mxu0
        %v597 = vadd.f32 0.0, %v596
        %v598 = vpop.f32.mrb[0].mxu0
        %599 = vdwg.mxu0
        %v616 = vunpack.c.l.b16 %v478
        %v617 = vunpack.c.l.b16 %v479
        %v618 = vunpack.c.l.b16 %v480
        %v619 = vunpack.c.l.b16 %v481
        %v620 = vunpack.c.l.b16 %v482
        %v621 = vunpack.c.l.b16 %v483
        %v622 = vunpack.c.l.b16 %v484
        %v623 = vunpack.c.l.b16 %v485
        %v624 = vunpack.c.l.b16 %v486
        %v625 = vunpack.c.l.b16 %v487
        %v626 = vunpack.c.l.b16 %v488
        %v627 = vunpack.c.l.b16 %v489
        %v628 = vunpack.c.l.b16 %v490
        %v629 = vunpack.c.l.b16 %v491
        %v630 = vunpack.c.l.b16 %v492
        %v631 = vunpack.c.l.b16 %v493
        %v632 = vpack.c.b16 %v617, %v616
        %v633 = vpack.c.b16 %v619, %v618
        %v634 = vpack.c.b16 %v621, %v620
        %v635 = vpack.c.b16 %v623, %v622
        %v636 = vpack.c.b16 %v625, %v624
        %v637 = vpack.c.b16 %v627, %v626
        %v638 = vpack.c.b16 %v629, %v628
        %v639 = vpack.c.b16 %v631, %v630
        %648 = vmatprep.subr.bf16.mxu0 0
        %649 = vmatpush1.bf16.msra.mxu0 %v632
        %650 = vmatprep.subr.bf16.mxu0 0
        %651 = vmatpush1.bf16.msra.mxu0 %v633
        %652 = vmatprep.subr.bf16.mxu0 0
        %653 = vmatpush1.bf16.msra.mxu0 %v634
        %654 = vmatprep.subr.bf16.mxu0 0
        %655 = vmatpush1.bf16.msra.mxu0 %v635
        %656 = vmatprep.subr.bf16.mxu0 0
        %657 = vmatpush1.bf16.msra.mxu0 %v636
        %658 = vmatprep.subr.bf16.mxu0 0
        %659 = vmatpush1.bf16.msra.mxu0 %v637
        %660 = vmatprep.subr.bf16.mxu0 0
        %661 = vmatpush1.bf16.msra.mxu0 %v638
        %662 = vmatprep.subr.bf16.mxu0 0
        %663 = vmatpush1.bf16.msra.mxu0 %v639
        %664 = vmatprep.subr.bf16.mxu0 0
        %665 = vmatpush1.bf16.msra.mxu0 0
        %666 = vmatprep.subr.bf16.mxu0 0
        %667 = vmatpush1.bf16.msra.mxu0 0
        %668 = vmatprep.subr.bf16.mxu0 0
        %669 = vmatpush1.bf16.msra.mxu0 0
        %670 = vmatprep.subr.bf16.mxu0 0
        %671 = vmatpush1.bf16.msra.mxu0 0
        %672 = vmatprep.subr.bf16.mxu0 0
        %673 = vmatpush1.bf16.msra.mxu0 0
        %674 = vmatprep.subr.bf16.mxu0 0
        %675 = vmatpush1.bf16.msra.mxu0 0
        %676 = vmatprep.subr.bf16.mxu0 0
        %677 = vmatpush1.bf16.msra.mxu0 0
        %678 = vmatprep.subr.bf16.mxu0 0
        %679 = vmatpush1.bf16.msra.mxu0 0
        %680 = vmatprep.mubr.bf16.mxu0 0
        %681 = vmatmul.mubr.bf16.gmra.mrb[0].mxu0 %v466
        %v682 = vpop.f32.mrb[0].mxu0
        %v683 = vadd.f32 %v594, %v682
        %v684 = vpop.f32.mrb[0].mxu0
        %v685 = vpop.f32.mrb[0].mxu0
        %v686 = vadd.f32 %v597, %v685
        %v687 = vpop.f32.mrb[0].mxu0
        %688 = vdwg.mxu0
        %s689 = scalar_lea.vmem [#allocation2], 128
        %v690 = vld [vmem:[%s689] sm:$0xf]
        %v691 = vld [vmem:[%s689 + $0x4] sm:$0xf]
        %v692 = vld [vmem:[%s689 + $0x8] sm:$0xf]
        %v693 = vld [vmem:[%s689 + $0xc] sm:$0xf]
        %v694 = vld [vmem:[%s689 + $0x10] sm:$0xf]
        %v695 = vld [vmem:[%s689 + $0x14] sm:$0xf]
        %v696 = vld [vmem:[%s689 + $0x18] sm:$0xf]
        %v697 = vld [vmem:[%s689 + $0x1c] sm:$0xf]
        %v698 = vld [vmem:[%s689 + $0x20] sm:$0xf]
        %v699 = vld [vmem:[%s689 + $0x24] sm:$0xf]
        %v700 = vld [vmem:[%s689 + $0x28] sm:$0xf]
        %v701 = vld [vmem:[%s689 + $0x2c] sm:$0xf]
        %v702 = vld [vmem:[%s689 + $0x30] sm:$0xf]
        %v703 = vld [vmem:[%s689 + $0x34] sm:$0xf]
        %v704 = vld [vmem:[%s689 + $0x38] sm:$0xf]
        %v705 = vld [vmem:[%s689 + $0x3c] sm:$0xf]
        %v722 = vunpack.c.l.b16 %v690
        %v723 = vunpack.c.l.b16 %v691
        %v724 = vunpack.c.l.b16 %v692
        %v725 = vunpack.c.l.b16 %v693
        %v726 = vunpack.c.l.b16 %v694
        %v727 = vunpack.c.l.b16 %v695
        %v728 = vunpack.c.l.b16 %v696
        %v729 = vunpack.c.l.b16 %v697
        %v730 = vunpack.c.l.b16 %v698
        %v731 = vunpack.c.l.b16 %v699
        %v732 = vunpack.c.l.b16 %v700
        %v733 = vunpack.c.l.b16 %v701
        %v734 = vunpack.c.l.b16 %v702
        %v735 = vunpack.c.l.b16 %v703
        %v736 = vunpack.c.l.b16 %v704
        %v737 = vunpack.c.l.b16 %v705
        %v738 = vpack.c.b16 %v723, %v722
        %v739 = vpack.c.b16 %v725, %v724
        %v740 = vpack.c.b16 %v727, %v726
        %v741 = vpack.c.b16 %v729, %v728
        %v742 = vpack.c.b16 %v731, %v730
        %v743 = vpack.c.b16 %v733, %v732
        %v744 = vpack.c.b16 %v735, %v734
        %v745 = vpack.c.b16 %v737, %v736
        %754 = vmatprep.subr.bf16.mxu0 0
        %755 = vmatpush1.bf16.msra.mxu0 %v738
        %756 = vmatprep.subr.bf16.mxu0 0
        %757 = vmatpush1.bf16.msra.mxu0 %v739
        %758 = vmatprep.subr.bf16.mxu0 0
        %759 = vmatpush1.bf16.msra.mxu0 %v740
        %760 = vmatprep.subr.bf16.mxu0 0
        %761 = vmatpush1.bf16.msra.mxu0 %v741
        %762 = vmatprep.subr.bf16.mxu0 0
        %763 = vmatpush1.bf16.msra.mxu0 %v742
        %764 = vmatprep.subr.bf16.mxu0 0
        %765 = vmatpush1.bf16.msra.mxu0 %v743
        %766 = vmatprep.subr.bf16.mxu0 0
        %767 = vmatpush1.bf16.msra.mxu0 %v744
        %768 = vmatprep.subr.bf16.mxu0 0
        %769 = vmatpush1.bf16.msra.mxu0 %v745
        %770 = vmatprep.subr.bf16.mxu0 0
        %771 = vmatpush1.bf16.msra.mxu0 0
        %772 = vmatprep.subr.bf16.mxu0 0
        %773 = vmatpush1.bf16.msra.mxu0 0
        %774 = vmatprep.subr.bf16.mxu0 0
        %775 = vmatpush1.bf16.msra.mxu0 0
        %776 = vmatprep.subr.bf16.mxu0 0
        %777 = vmatpush1.bf16.msra.mxu0 0
        %778 = vmatprep.subr.bf16.mxu0 0
        %779 = vmatpush1.bf16.msra.mxu0 0
        %780 = vmatprep.subr.bf16.mxu0 0
        %781 = vmatpush1.bf16.msra.mxu0 0
        %782 = vmatprep.subr.bf16.mxu0 0
        %783 = vmatpush1.bf16.msra.mxu0 0
        %784 = vmatprep.subr.bf16.mxu0 0
        %785 = vmatpush1.bf16.msra.mxu0 0
        %786 = vmatprep.mubr.bf16.mxu0 0
        %787 = vmatmul.mubr.bf16.gmra.mrb[0].mxu0 %v477
        %v788 = vpop.f32.mrb[0].mxu0
        %v789 = vadd.f32 0.0, %v788
        %v790 = vpop.f32.mrb[0].mxu0
        %v791 = vpop.f32.mrb[0].mxu0
        %v792 = vadd.f32 0.0, %v791
        %v793 = vpop.f32.mrb[0].mxu0
        %794 = vdwg.mxu0
        %v795 = vadd.f32 %v683, %v789
        %v796 = vadd.f32 %v686, %v792
        %v798 = vlaneseq
        %v799 = vshrl.u32 %v798, 7
        %v800 = vsub.s32 0, %v799
        %v801 = vrot.slane %v328, %v800
        %v803 = vadd.f32 %v795, %v801
        %v804 = vadd.f32 %v796, %v801
        %v805 = vmax.f32 %v803, 0.0
        %v806 = vmax.f32 %v804, 0.0
        %v807 = vpack.c.bf16 %v806, %v805
        %v809 = vunpack.c.l.b16 %v807
        %v810 = vunpack.c.h.b16 %v807
        %v811 = vpack.c.b16 %v809, %v809
        %v812 = vpack.c.b16 %v810, %v810
        %815 = vst [vmem:[%s305] sm:$0xf] %v811
        %816 = vst [vmem:[%s305 + $0x4] sm:$0xf] %v812
        %s817 = sand.u32 %s183, 1
        %s818 = scalar_lea.sflag [#allocation4], %s817
        %s819 = sand.u32 %s183, 1
        %s820 = smul.addr %s819, 8
        %s821 = scalar_lea.vmem [#allocation5], %s820
        // Predicated region
        $region49: #{tpu_custom_call.1} parent=43 // pred_check
          %p822 = pneg %p193
        $region50: #{tpu_custom_call.1} parent=43 // pred_check_branch
          %824 = sbr.rel (%p822) target = $region52
        $region51: #{tpu_custom_call.1} parent=43 // pred_region
          %s825 = smul.u32 2, %s26
          %s827 = ssub.s32 128, 128
          %828 = vsyncadd %s818, %s827
          %s829 = smul.addr %s25, 4
          %s830 = sadd.s32 %s825, %s829
          %s831 = smul.addr %s830, 64
          %s832 = scalar_lea.hbm %s6, %s831
          %s833 = sshll.u32 %s821, 4
          %s834 = int_to_ptr.vmem [resolvable:$true] %s833
          %839 = dma.vmem_to_hbm [thread:$0]  %s834, 128, %s832, %s818, 64, 64, 4
        $region52: #{tpu_custom_call.1} parent=43 // pred_fallthru
          _
      $region44: #{tpu_custom_call.1} parent=5 // pred_fallthru
        _
      %p840 = scmp.le.s32.totalorder 2, %s16
      // Predicated region
      $region53: #{tpu_custom_call.1} parent=5 // pred_check
        %p841 = pneg %p840
      $region54: #{tpu_custom_call.1} parent=5 // pred_check_branch
        %843 = sbr.rel (%p841) target = $region56
      $region55: #{tpu_custom_call.1} parent=5 // pred_region
        %s844 = ssub.s32 %s16, 2
        // Predicated region
        $region57: #{tpu_custom_call.1} parent=55 // pred_check
          %p845 = pneg %p199
        $region58: #{tpu_custom_call.1} parent=55 // pred_check_branch
          %847 = sbr.rel (%p845) target = $region60
        $region59: #{tpu_custom_call.1} parent=55 // pred_region
          %s848 = sand.u32 %s184, 1
          %s849 = scalar_lea.sflag [#allocation4], %s848
          %s850 = sand.u32 %s184, 1
          %s851 = smul.addr %s850, 8
          %s852 = scalar_lea.vmem [#allocation5], %s851
          %853 = dma.done %s849, 128
        $region60: #{tpu_custom_call.1} parent=55 // pred_fallthru
          _
      $region56: #{tpu_custom_call.1} parent=5 // pred_fallthru
        _
    $region6: #{tpu_custom_call.1} parent=1 // loop_footer
      %s20 = sadd.s32 1, %s16
    $region7: #{tpu_custom_call.1} parent=1 // loop_footer_branch
      %15 = sbr.rel target = $region3
    $region8: #{tpu_custom_call.1} parent=1 // loop_exit
      _
    %854 = vsyncpa [#allocation3], 1
    %s855 = scalar_lea.sflag [#allocation3], 1
    %856 = vsyncpa %s855, 1
    %857 = vsyncpa [#allocation4], 1
    %s858 = scalar_lea.sflag [#allocation4], 1
    %859 = vsyncpa %s858, 1

</llo_original>
